<compile_context>
chip_gen: v7x
topology: tpu7x:2x2x1
jax: 0.10.0
libtpu: 0.0.40
codegen_flags: <defaults>
</compile_context>

<pallas_src>
import functools

import jax
import jax.numpy as jnp
from jax.experimental import pallas as pl
from jax.experimental.pallas import tpu as pltpu

L2_EPS = 1e-12   # eps of l2normalize in the PyTorch reference


def _round_up(x, m):
    return (x + m - 1) // m * m


def _device_kind():
    try:
        return jax.devices()[0].device_kind.lower()
    except Exception:
        return ""


def _num_tensorcores(kind):
    # v7x (and the older v3/v4 megacore chips) expose 2 TensorCores per chip;
    # v5e / v6e are single-TC.
    return 2 if ("v7" in kind or "v4" in kind or "v3" in kind) else 1


def _pick_tile_m(m, num_cores):
    tm = 512
    if num_cores > 1:
        # expose >= 2 blocks on the leading "parallel" axis so both TCs get work
        while tm > 128 and m <= tm:
            tm //= 2
    if m < tm:
        tm = max(16, _round_up(m, 16))   # bf16 packs 2 rows/sublane -> multiple of 16
    return tm


def _pick_tile_c(cp, kind):
    # v6e/v7x MXUs are 256 wide; a 256-wide N tile fills the array when Cout allows.
    if cp % 256 == 0 and ("v6" in kind or "v7" in kind):
        return 256
    return 128


# ----------------------------- Pallas kernels -----------------------------

def _spectral_norm_kernel(wt_ref, u_ref, v_ref, wmat_ref, u_out_ref, v_out_ref,
                          *, power_iterations):
    """Power iteration + sigma + 1/sigma scaling, all on W^T.

    wt_ref : [Kd, Co]  zero-padded W^T (Kd = pad(Cin*K*K,128), Co = pad(Cout,128))
    u_ref  : [1,  Co]  zero-padded u (row)
    v_ref  : [Kd, 1 ]  zero-padded v (column)
    Outputs: bf16 GEMM weight (W^T / sigma), updated u, updated v.
    """
    wt = wt_ref[...]
    u = u_ref[...]
    v = v_ref[...]
    wv = None
    for _ in range(power_iterations):
        # v <- l2normalize(W^T u):  (W^T u)_j = sum_i wt[j, i] * u[i]
        wtu = jnp.sum(wt * u, axis=1, keepdims=True)                     # [Kd, 1]
        v = wtu / (jnp.sqrt(jnp.sum(wtu * wtu, keepdims=True)) + L2_EPS)
        # u <- l2normalize(W v):    (W v)_i = sum_j wt[j, i] * v[j]
        wv = jnp.sum(wt * v, axis=0, keepdims=True)                      # [1, Co]
        u = wv / (jnp.sqrt(jnp.sum(wv * wv, keepdims=True)) + L2_EPS)
    # sigma = u . (W v) -- wv from the last iteration already holds W v for the
    # final v (independent of u), so no recompute of the [Kd,Co] reduce.
    sigma = jnp.sum(u * wv, keepdims=True)                               # (1, 1)
    inv_sigma = pl.reciprocal(sigma, approx=True)                        # EUP slot
    wmat_ref[...] = (wt * inv_sigma).astype(wmat_ref.dtype)
    u_out_ref[...] = u
    v_out_ref[...] = v


def pallas_spectral_norm(w_bar, u, v, power_iterations=1):
    """w_bar: [Cout, Cin, K, K], u: [Cout], v: [Cin*K*K].

    Returns (w_gemm [Kd, Co] bf16, u_new [Cout] f32, v_new [width] f32) where
    w_gemm = (W / sigma)^T zero-padded to lane-dense 128 multiples -- exactly
    the B matrix for the im2col GEMM of the wrapped Conv2d.
    """
    assert power_iterations >= 1, "PyTorch SpectralNorm requires power_iterations >= 1"
    cout = w_bar.shape[0]
    width = w_bar.size // cout
    kd = _round_up(width, 128)
    co = _round_up(cout, 128)
    wt = jnp.transpose(w_bar.reshape(cout, width))                       # [width, cout]
    wt_p = jnp.pad(wt, ((0, kd - width), (0, co - cout)))
    u_p = jnp.pad(u.reshape(1, cout), ((0, 0), (0, co - cout)))
    v_p = jnp.pad(v.reshape(width, 1), ((0, kd - width), (0, 0)))
    # Single-block (grid-less) kernel: raise the scoped VMEM limit enough for
    # large discriminator layers (f32 in + bf16 out + f32 temporaries), capped
    # below v7x's 64 MiB physical VMEM.
    need = kd * co * (4 + 2 + 4 + 4) + (kd + co) * 32 + (1 << 20)
    vmem_limit = int(min(max(need, 32 << 20), 60 << 20))
    wmat, u_new, v_new = pl.pallas_call(
        functools.partial(_spectral_norm_kernel,
                          power_iterations=power_iterations),
        out_shape=(jax.ShapeDtypeStruct((kd, co), jnp.bfloat16),
                   jax.ShapeDtypeStruct((1, co), jnp.float32),
                   jax.ShapeDtypeStruct((kd, 1), jnp.float32)),
        compiler_params=pltpu.CompilerParams(vmem_limit_bytes=vmem_limit),
    )(wt_p, u_p, v_p)
    return wmat, u_new[0, :cout], v_new[:width, 0]


def _matmul_bias_single_k_kernel(a_ref, b_ref, bias_ref, o_ref):
    # Single reduction step: no accumulator scratch, no pl.when branches.
    o_ref[...] = (jnp.dot(a_ref[...], b_ref[...],
                          preferred_element_type=jnp.float32)
                  + bias_ref[...]).astype(o_ref.dtype)


def _matmul_bias_kernel(a_ref, b_ref, bias_ref, o_ref, acc_ref):
    k = pl.program_id(2)

    @pl.when(k == 0)
    def _():
        acc_ref[...] = jnp.zeros_like(acc_ref)

    acc_ref[...] += jnp.dot(a_ref[...], b_ref[...],
                            preferred_element_type=jnp.float32)

    @pl.when(k == pl.num_programs(2) - 1)
    def _():
        o_ref[...] = (acc_ref[...] + bias_ref[...]).astype(o_ref.dtype)


def pallas_matmul_bias(a, b, bias):
    """a: [M, K] (cast to bf16), b: [Kp, Cp] bf16 already 128-padded (the GEMM
    weight emitted by the spectral-norm kernel), bias: [Cout] f32.
    Returns bf16 [Mp, Cp] = a @ b + bias with f32 MXU accumulation; the caller
    slices the M / Cout padding off in a single fused slice."""
    m, kk = a.shape
    kp, cp = b.shape
    kind = _device_kind()
    tm = _pick_tile_m(m, _num_tensorcores(kind))
    mp = _round_up(m, tm)
    tc = _pick_tile_c(cp, kind)
    a_p = a.astype(jnp.bfloat16)
    if (mp, kp) != (m, kk):
        a_p = jnp.pad(a_p, ((0, mp - m), (0, kp - kk)))      # pad in bf16 only
    bias_p = jnp.pad(bias.astype(jnp.float32).reshape(1, -1),
                     ((0, 0), (0, cp - bias.shape[0])))

    if kp <= 512:
        # Common conv case: the whole (padded) contraction fits one tile.
        # Collapse the K grid axis; B's block index is constant across i so the
        # small normalized weight stays VMEM-resident (no re-DMA per M tile).
        return pl.pallas_call(
            _matmul_bias_single_k_kernel,
            out_shape=jax.ShapeDtypeStruct((mp, cp), jnp.bfloat16),
            grid=(mp // tm, cp // tc),
            in_specs=[
                pl.BlockSpec((tm, kp), lambda i, j: (i, 0)),
                pl.BlockSpec((kp, tc), lambda i, j: (0, j)),
                pl.BlockSpec((1, tc), lambda i, j: (0, j)),
            ],
            out_specs=pl.BlockSpec((tm, tc), lambda i, j: (i, j)),
            compiler_params=pltpu.CompilerParams(
                dimension_semantics=("parallel", "parallel")),
        )(a_p, b, bias_p)

    # General fallback for large Cin*K*K: tiled K reduction with f32 accumulator.
    tk = 512 if kp % 512 == 0 else (256 if kp % 256 == 0 else 128)
    return pl.pallas_call(
        _matmul_bias_kernel,
        out_shape=jax.ShapeDtypeStruct((mp, cp), jnp.bfloat16),
        grid=(mp // tm, cp // tc, kp // tk),
        in_specs=[
            pl.BlockSpec((tm, tk), lambda i, j, k: (i, k)),
            pl.BlockSpec((tk, tc), lambda i, j, k: (k, j)),
            pl.BlockSpec((1, tc), lambda i, j, k: (0, j)),
        ],
        out_specs=pl.BlockSpec((tm, tc), lambda i, j, k: (i, j)),
        scratch_shapes=[pltpu.VMEM((tm, tc), jnp.float32)],
        compiler_params=pltpu.CompilerParams(
            dimension_semantics=("parallel", "parallel", "arbitrary")),
    )(a_p, b, bias_p)


# ------------------------------- JAX glue ----------------------------------

def conv2d_im2col(x, w_gemm, bias, cout, ksize, stride, padding):
    """PyTorch nn.Conv2d semantics (zero padding) using the spectrally
    normalized GEMM weight w_gemm = (W / sigma)^T padded to [Kd, Co]."""
    n, cin, h, w = x.shape
    p = padding
    xb = x.astype(jnp.bfloat16)                          # build patches in bf16
    xp = jnp.pad(xb, ((0, 0), (0, 0), (p, p), (p, p))) if p > 0 else xb
    hp, wp = h + 2 * p, w + 2 * p
    ho = (hp - ksize) // stride + 1
    wo = (wp - ksize) // stride + 1
    # TODO(synk): fuse im2col into the GEMM (the K*K taps as the "arbitrary"
    # reduction grid axis with shifted index_maps) to remove the K*K x HBM read
    # amplification of x at large resolutions.
    patches = []
    for ky in range(ksize):
        for kx in range(ksize):
            patches.append(xp[:, :,
                              ky:ky + stride * (ho - 1) + 1:stride,
                              kx:kx + stride * (wo - 1) + 1:stride])
    pat = jnp.stack(patches, axis=-1)                    # [N, Cin, Ho, Wo, K*K] bf16
    pat = pat.transpose(0, 2, 3, 1, 4).reshape(n * ho * wo, cin * ksize * ksize)
    out = pallas_matmul_bias(pat, w_gemm, bias)          # [Mp, Cp] bf16
    out = out[:n * ho * wo, :cout]                       # single fused slice
    # NHWC -> NCHW transpose on bf16 + f32 cast fuse into one XLA copy.
    return out.reshape(n, ho, wo, cout).transpose(0, 3, 1, 2).astype(jnp.float32)


def spectral_norm_conv_forward(params, x, power_iterations=1):
    """SpectralNorm(Conv2d).forward: update (u, v), scale the weight by 1/sigma,
    run the wrapped conv.  PyTorch mutates the u/v Parameters in place; here
    the updated state is returned alongside the module output."""
    w_bar = params["weight_bar"]
    cout, _, ksize, _ = w_bar.shape
    w_gemm, u_new, v_new = pallas_spectral_norm(
        w_bar, params["weight_u"], params["weight_v"], power_iterations)
    y = conv2d_im2col(x, w_gemm, params["bias"], cout, ksize,
                      stride=1, padding=ksize // 2)
    return y, u_new, v_new


# --------------------------- pure-JAX reference -----------------------------

def _l2normalize(z, eps=L2_EPS):
    return z / (jnp.linalg.norm(z) + eps)


def reference_forward(params, x, power_iterations=1):
    w_bar = params["weight_bar"]
    cout = w_bar.shape[0]
    wm = w_bar.reshape(cout, -1)
    u = params["weight_u"]
    v = params["weight_v"]
    for _ in range(power_iterations):
        v = _l2normalize(wm.T @ u)
        u = _l2normalize(wm @ v)
    sigma = u @ (wm @ v)
    w_sn = w_bar / sigma
    y = jax.lax.conv_general_dilated(
        x, w_sn, window_strides=(1, 1), padding=((1, 1), (1, 1)),
        dimension_numbers=("NCHW", "OIHW", "NCHW"))
    return y + params["bias"].reshape(1, -1, 1, 1), u, v


# --------------------------------- main -------------------------------------

if __name__ == "__main__":
    key = jax.random.PRNGKey(0)
    k_w, k_b, k_u, k_v, k_x = jax.random.split(key, 5)
    cin, cout, ksize = 4, 32, 3
    width = cin * ksize * ksize
    params = {
        "weight_bar": 0.1 * jax.random.normal(k_w, (cout, cin, ksize, ksize),
                                              jnp.float32),
        "bias": 0.01 * jax.random.normal(k_b, (cout,), jnp.float32),
        "weight_u": _l2normalize(jax.random.normal(k_u, (cout,), jnp.float32)),
        "weight_v": _l2normalize(jax.random.normal(k_v, (width,), jnp.float32)),
    }
    x = jax.random.normal(k_x, (2, cin, 16, 16), jnp.float32)   # NCHW, like PyTorch

    fwd = jax.jit(spectral_norm_conv_forward)
    y, u_new, v_new = jax.block_until_ready(fwd(params, x))

    assert y.shape == (2, cout, 16, 16), y.shape
    assert bool(jnp.all(jnp.isfinite(y)))

    # correctness vs pure-JAX f32 reference (kernel path uses bf16 MXU inputs
    # and a bf16 GEMM output; the tolerance absorbs that)
    y_ref, u_ref, v_ref = reference_forward(params, x)
    assert float(jnp.max(jnp.abs(u_new - u_ref))) < 1e-4
    assert float(jnp.max(jnp.abs(v_new - v_ref))) < 1e-4
    assert float(jnp.max(jnp.abs(y - y_ref))) < 5e-2

    print("KERNEL_OK")
</pallas_src>

<mosaic_0001>
module attributes {stable_mosaic.version = 11 : i64} {
  func.func @_spectral_norm_kernel(%arg0: memref<128x128xf32, #tpu.memory_space<vmem>>, %arg1: memref<1x128xf32, #tpu.memory_space<vmem>>, %arg2: memref<128x1xf32, #tpu.memory_space<vmem>>, %arg3: memref<128x128xbf16, #tpu.memory_space<vmem>>, %arg4: memref<1x128xf32, #tpu.memory_space<vmem>>, %arg5: memref<128x1xf32, #tpu.memory_space<vmem>>) attributes {dimension_semantics = [], scalar_prefetch = 0 : i64, scratch_operands = 0 : i64, tpu.core_type = #tpu.core_type<tc>} {
    %c0 = arith.constant 0 : index
    %c0_0 = arith.constant 0 : index
    %0 = vector.load %arg0[%c0, %c0_0] : memref<128x128xf32, #tpu.memory_space<vmem>>, vector<128x128xf32>
    %c0_1 = arith.constant 0 : index
    %c0_2 = arith.constant 0 : index
    %1 = vector.load %arg1[%c0_1, %c0_2] : memref<1x128xf32, #tpu.memory_space<vmem>>, vector<1x128xf32>
    %2 = vector.broadcast %1 : vector<1x128xf32> to vector<128x128xf32>
    %3 = arith.mulf %0, %2 : vector<128x128xf32>
    %cst = arith.constant dense<0.000000e+00> : vector<128xf32>
    %4 = vector.multi_reduction <add>, %3, %cst [1] : vector<128x128xf32> to vector<128xf32>
    %5 = vector.shape_cast %4 : vector<128xf32> to vector<128x1xf32>
    %6 = arith.mulf %5, %5 : vector<128x1xf32>
    %7 = vector.shape_cast %6 : vector<128x1xf32> to vector<1x128x1xf32>
    %cst_3 = arith.constant dense<0.000000e+00> : vector<1xf32>
    %8 = vector.multi_reduction <add>, %7, %cst_3 [1, 2] : vector<1x128x1xf32> to vector<1xf32>
    %9 = vector.shape_cast %8 : vector<1xf32> to vector<1x1x1xf32>
    %10 = vector.extract %9[0, 0, 0] : f32 from vector<1x1x1xf32>
    %11 = vector.broadcast %10 : f32 to vector<1x1xf32>
    %12 = math.sqrt %11 : vector<1x1xf32>
    %cst_4 = arith.constant 9.99999996E-13 : f32
    %13 = vector.broadcast %cst_4 : f32 to vector<1x1xf32>
    %14 = arith.addf %12, %13 : vector<1x1xf32>
    %15 = vector.broadcast %14 : vector<1x1xf32> to vector<128x1xf32>
    %16 = arith.divf %5, %15 : vector<128x1xf32>
    %17 = vector.broadcast %16 : vector<128x1xf32> to vector<128x128xf32>
    %18 = arith.mulf %0, %17 : vector<128x128xf32>
    %cst_5 = arith.constant dense<0.000000e+00> : vector<128xf32>
    %19 = vector.multi_reduction <add>, %18, %cst_5 [0] : vector<128x128xf32> to vector<128xf32>
    %20 = vector.shape_cast %19 : vector<128xf32> to vector<1x128xf32>
    %21 = arith.mulf %20, %20 : vector<1x128xf32>
    %22 = vector.shape_cast %21 : vector<1x128xf32> to vector<1x1x128xf32>
    %cst_6 = arith.constant dense<0.000000e+00> : vector<1xf32>
    %23 = vector.multi_reduction <add>, %22, %cst_6 [1, 2] : vector<1x1x128xf32> to vector<1xf32>
    %24 = vector.shape_cast %23 : vector<1xf32> to vector<1x1x1xf32>
    %25 = vector.extract %24[0, 0, 0] : f32 from vector<1x1x1xf32>
    %26 = vector.broadcast %25 : f32 to vector<1x1xf32>
    %27 = math.sqrt %26 : vector<1x1xf32>
    %cst_7 = arith.constant 9.99999996E-13 : f32
    %28 = vector.broadcast %cst_7 : f32 to vector<1x1xf32>
    %29 = arith.addf %27, %28 : vector<1x1xf32>
    %30 = vector.broadcast %29 : vector<1x1xf32> to vector<1x128xf32>
    %31 = arith.divf %20, %30 : vector<1x128xf32>
    %32 = arith.mulf %31, %20 : vector<1x128xf32>
    %33 = vector.shape_cast %32 : vector<1x128xf32> to vector<1x1x128xf32>
    %cst_8 = arith.constant dense<0.000000e+00> : vector<1xf32>
    %34 = vector.multi_reduction <add>, %33, %cst_8 [1, 2] : vector<1x1x128xf32> to vector<1xf32>
    %35 = vector.shape_cast %34 : vector<1xf32> to vector<1x1x1xf32>
    %36 = vector.extract %35[0, 0, 0] : f32 from vector<1x1x1xf32>
    %37 = vector.broadcast %36 : f32 to vector<1x1xf32>
    %38 = tpu.reciprocal %37 {approx = true} : vector<1x1xf32> -> vector<1x1xf32>
    %39 = vector.broadcast %38 : vector<1x1xf32> to vector<128x128xf32>
    %40 = arith.mulf %0, %39 : vector<128x128xf32>
    %41 = arith.truncf %40 : vector<128x128xf32> to vector<128x128xbf16>
    %c0_9 = arith.constant 0 : index
    %c0_10 = arith.constant 0 : index
    %42 = vector.load %arg3[%c0_9, %c0_10] : memref<128x128xbf16, #tpu.memory_space<vmem>>, vector<128x128xbf16>
    tpu.vector_store %arg3[%c0_9, %c0_10], %41 {strides = array<i32>} : memref<128x128xbf16, #tpu.memory_space<vmem>>, vector<128x128xbf16>,
    %c0_11 = arith.constant 0 : index
    %c0_12 = arith.constant 0 : index
    %43 = vector.load %arg4[%c0_11, %c0_12] : memref<1x128xf32, #tpu.memory_space<vmem>>, vector<1x128xf32>
    tpu.vector_store %arg4[%c0_11, %c0_12], %31 {strides = array<i32>} : memref<1x128xf32, #tpu.memory_space<vmem>>, vector<1x128xf32>,
    %c0_13 = arith.constant 0 : index
    %c0_14 = arith.constant 0 : index
    %44 = vector.load %arg5[%c0_13, %c0_14] : memref<128x1xf32, #tpu.memory_space<vmem>>, vector<128x1xf32>
    tpu.vector_store %arg5[%c0_13, %c0_14], %16 {strides = array<i32>} : memref<128x1xf32, #tpu.memory_space<vmem>>, vector<128x1xf32>,
    return
  }
}

module attributes {stable_mosaic.version = 11 : i64} {
  func.func @_matmul_bias_single_k_kernel(%arg0: i32, %arg1: i32, %arg2: memref<512x128xbf16, #tpu.memory_space<vmem>>, %arg3: memref<128x128xbf16, #tpu.memory_space<vmem>>, %arg4: memref<1x128xf32, #tpu.memory_space<vmem>>, %arg5: memref<512x128xbf16, #tpu.memory_space<vmem>>) attributes {dimension_semantics = [#tpu.dimension_semantics<parallel>, #tpu.dimension_semantics<parallel>], iteration_bounds = array<i64: 1, 1>, scalar_prefetch = 0 : i64, scratch_operands = 0 : i64, tpu.core_type = #tpu.core_type<tc>, window_params = [{transform_indices = @transform_0, window_bounds = array<i64: 512, 128>}, {transform_indices = @transform_1, window_bounds = array<i64: 128, 128>}, {transform_indices = @transform_2, window_bounds = array<i64: 1, 128>}, {transform_indices = @transform_3, window_bounds = array<i64: 512, 128>}]} {
    %c0 = arith.constant 0 : index
    %c0_0 = arith.constant 0 : index
    %0 = vector.load %arg2[%c0, %c0_0] : memref<512x128xbf16, #tpu.memory_space<vmem>>, vector<512x128xbf16>
    %c0_1 = arith.constant 0 : index
    %c0_2 = arith.constant 0 : index
    %1 = vector.load %arg3[%c0_1, %c0_2] : memref<128x128xbf16, #tpu.memory_space<vmem>>, vector<128x128xbf16>
    %cst = arith.constant dense<0.000000e+00> : vector<512x128xf32>
    %2 = tpu.matmul %0, %1, %cst {dimension_numbers = #tpu.dot_dimension_numbers<[1], [0], [0], [1], [0, 0, 1, 1], [], []>} : vector<512x128xbf16>, vector<128x128xbf16>, vector<512x128xf32> -> vector<512x128xf32>
    %c0_3 = arith.constant 0 : index
    %c0_4 = arith.constant 0 : index
    %3 = vector.load %arg4[%c0_3, %c0_4] : memref<1x128xf32, #tpu.memory_space<vmem>>, vector<1x128xf32>
    %4 = vector.broadcast %3 : vector<1x128xf32> to vector<512x128xf32>
    %5 = arith.addf %2, %4 : vector<512x128xf32>
    %6 = arith.truncf %5 : vector<512x128xf32> to vector<512x128xbf16>
    %c0_5 = arith.constant 0 : index
    %c0_6 = arith.constant 0 : index
    %7 = vector.load %arg5[%c0_5, %c0_6] : memref<512x128xbf16, #tpu.memory_space<vmem>>, vector<512x128xbf16>
    tpu.vector_store %arg5[%c0_5, %c0_6], %6 {strides = array<i32>} : memref<512x128xbf16, #tpu.memory_space<vmem>>, vector<512x128xbf16>,
    return
  }
  func.func @transform_0(%arg0: i32, %arg1: i32) -> (i32, i32) {
    %c0_i32 = arith.constant 0 : i32
    %c0_i32_0 = arith.constant 0 : i32
    return %arg0, %c0_i32 : i32, i32
  }
  func.func @transform_1(%arg0: i32, %arg1: i32) -> (i32, i32) {
    %c0_i32 = arith.constant 0 : i32
    %c0_i32_0 = arith.constant 0 : i32
    return %c0_i32, %arg1 : i32, i32
  }
  func.func @transform_2(%arg0: i32, %arg1: i32) -> (i32, i32) {
    %c0_i32 = arith.constant 0 : i32
    %c0_i32_0 = arith.constant 0 : i32
    return %c0_i32, %arg1 : i32, i32
  }
  func.func @transform_3(%arg0: i32, %arg1: i32) -> (i32, i32) {
    %c0_i32 = arith.constant 0 : i32
    return %arg0, %arg1 : i32, i32
  }
}

</mosaic_0001>

<llo_original>
// kernel: spectral_norm_conv_forward.2
$region0: #{spectral_norm_conv_forward.2}
  #allocation0 [shape = 'u32[]', space=smem, size = 0x4, offset = 0x4, fixed_abs, tag = 'smem constant byte address 0x4 - core index']
  #allocation1 [shape = 'u32[144,128]{1,0:T(1,128)}', space=vmem, size = 0x12000, scoped, tag = 'internal scratch']
  %s0 = inlined_call_operand.vmem [shape: f32[128,128], index: 0, kind: input, shape index: {}]
  %s1 = inlined_call_operand.vmem [shape: f32[1,128], index: 1, kind: input, shape index: {}]
  %s2 = inlined_call_operand.vmem [shape: f32[128,1], index: 2, kind: input, shape index: {}]
  %s3 = inlined_call_operand.vmem [shape: bf16[128,128], index: 3, kind: output, shape index: {0}]
  %s4 = inlined_call_operand.vmem [shape: f32[1,128], index: 4, kind: output, shape index: {1}]
  %s5 = inlined_call_operand.vmem [shape: f32[128,1], index: 5, kind: output, shape index: {2}]
  %6 = xla_tuple %s3, %s4, %s5
  %s7 = sld [smem:[#allocation0]]
  $region38: #{spectral_norm_conv_forward.2} parent=0
    _
  %s9 = ssub.s32 1, %s7
  %s10 = scalar_select 0, %s9, %s7
  // Predicated region
  $region2: #{spectral_norm_conv_forward.2} parent=0 // pred_check
    _
  $region3: #{spectral_norm_conv_forward.2} parent=0 // pred_check_branch
    %12 = sbr.rel (0) target = $region5
  $region4: #{spectral_norm_conv_forward.2} parent=0 // pred_region
    _
  $region5: #{spectral_norm_conv_forward.2} parent=0 // pred_fallthru
    _
  // Predicated region
  $region6: #{spectral_norm_conv_forward.2} parent=0 // pred_check
    _
  $region7: #{spectral_norm_conv_forward.2} parent=0 // pred_check_branch
    %14 = sbr.rel (0) target = $region9
  $region8: #{spectral_norm_conv_forward.2} parent=0 // pred_region
    _
  $region9: #{spectral_norm_conv_forward.2} parent=0 // pred_fallthru
    _
  // Predicated region
  $region10: #{spectral_norm_conv_forward.2} parent=0 // pred_check
    _
  $region11: #{spectral_norm_conv_forward.2} parent=0 // pred_check_branch
    %16 = sbr.rel (0) target = $region13
  $region12: #{spectral_norm_conv_forward.2} parent=0 // pred_region
    _
  $region13: #{spectral_norm_conv_forward.2} parent=0 // pred_fallthru
    _
  %v17 = vld [vmem:[%s0] sm:$0xff]
  %v18 = vld [vmem:[%s0 + $0x8] sm:$0xff]
  %v19 = vld [vmem:[%s0 + $0x10] sm:$0xff]
  %v20 = vld [vmem:[%s0 + $0x18] sm:$0xff]
  %v21 = vld [vmem:[%s0 + $0x20] sm:$0xff]
  %v22 = vld [vmem:[%s0 + $0x28] sm:$0xff]
  %v23 = vld [vmem:[%s0 + $0x30] sm:$0xff]
  %v24 = vld [vmem:[%s0 + $0x38] sm:$0xff]
  %v25 = vld [vmem:[%s0 + $0x40] sm:$0xff]
  %v26 = vld [vmem:[%s0 + $0x48] sm:$0xff]
  %v27 = vld [vmem:[%s0 + $0x50] sm:$0xff]
  %v28 = vld [vmem:[%s0 + $0x58] sm:$0xff]
  %v29 = vld [vmem:[%s0 + $0x60] sm:$0xff]
  %v30 = vld [vmem:[%s0 + $0x68] sm:$0xff]
  %v31 = vld [vmem:[%s0 + $0x70] sm:$0xff]
  %v32 = vld [vmem:[%s0 + $0x78] sm:$0xff]
  %v33 = vld [vmem:[%s1] sm:$0x1]
  %v35 = vlaneseq
  %v36 = vshrl.u32 %v35, 7
  %v37 = vsub.s32 0, %v36
  %v38 = vrot.slane %v33, %v37
  %v40 = vmul.f32 %v17, %v38
  %v41 = vmul.f32 %v18, %v38
  %v42 = vmul.f32 %v19, %v38
  %v43 = vmul.f32 %v20, %v38
  %v44 = vmul.f32 %v21, %v38
  %v45 = vmul.f32 %v22, %v38
  %v46 = vmul.f32 %v23, %v38
  %v47 = vmul.f32 %v24, %v38
  %v48 = vmul.f32 %v25, %v38
  %v49 = vmul.f32 %v26, %v38
  %v50 = vmul.f32 %v27, %v38
  %v51 = vmul.f32 %v28, %v38
  %v52 = vmul.f32 %v29, %v38
  %v53 = vmul.f32 %v30, %v38
  %v54 = vmul.f32 %v31, %v38
  %v55 = vmul.f32 %v32, %v38
  %56 = vadd.xlane.f32.xlu0 %v40
  %v57 = vpop.xlane.xlu0 %56
  %58 = vadd.xlane.f32.xlu0 %v41
  %v59 = vpop.xlane.xlu0 %58
  %60 = vadd.xlane.f32.xlu0 %v42
  %v61 = vpop.xlane.xlu0 %60
  %62 = vadd.xlane.f32.xlu0 %v43
  %v63 = vpop.xlane.xlu0 %62
  %64 = vadd.xlane.f32.xlu0 %v44
  %v65 = vpop.xlane.xlu0 %64
  %66 = vadd.xlane.f32.xlu0 %v45
  %v67 = vpop.xlane.xlu0 %66
  %68 = vadd.xlane.f32.xlu0 %v46
  %v69 = vpop.xlane.xlu0 %68
  %70 = vadd.xlane.f32.xlu0 %v47
  %v71 = vpop.xlane.xlu0 %70
  %72 = vadd.xlane.f32.xlu0 %v48
  %v73 = vpop.xlane.xlu0 %72
  %74 = vadd.xlane.f32.xlu0 %v49
  %v75 = vpop.xlane.xlu0 %74
  %76 = vadd.xlane.f32.xlu0 %v50
  %v77 = vpop.xlane.xlu0 %76
  %78 = vadd.xlane.f32.xlu0 %v51
  %v79 = vpop.xlane.xlu0 %78
  %80 = vadd.xlane.f32.xlu0 %v52
  %v81 = vpop.xlane.xlu0 %80
  %82 = vadd.xlane.f32.xlu0 %v53
  %v83 = vpop.xlane.xlu0 %82
  %84 = vadd.xlane.f32.xlu0 %v54
  %v85 = vpop.xlane.xlu0 %84
  %86 = vadd.xlane.f32.xlu0 %v55
  %v87 = vpop.xlane.xlu0 %86
  %v88 = vmul.f32 %v57, %v57
  %v89 = vmul.f32 %v59, %v59
  %v90 = vmul.f32 %v61, %v61
  %v91 = vmul.f32 %v63, %v63
  %v92 = vmul.f32 %v65, %v65
  %v93 = vmul.f32 %v67, %v67
  %v94 = vmul.f32 %v69, %v69
  %v95 = vmul.f32 %v71, %v71
  %v96 = vmul.f32 %v73, %v73
  %v97 = vmul.f32 %v75, %v75
  %v98 = vmul.f32 %v77, %v77
  %v99 = vmul.f32 %v79, %v79
  %v100 = vmul.f32 %v81, %v81
  %v101 = vmul.f32 %v83, %v83
  %v102 = vmul.f32 %v85, %v85
  %v103 = vmul.f32 %v87, %v87
  %vm104 = vcmask 7168
  %v105 = vsel %vm104, %v88, 0.0
  %v106 = vsel %vm104, %v89, 0.0
  %v107 = vadd.f32 %v105, %v106
  %v108 = vsel %vm104, %v90, 0.0
  %v109 = vadd.f32 %v107, %v108
  %v110 = vsel %vm104, %v91, 0.0
  %v111 = vadd.f32 %v109, %v110
  %v112 = vsel %vm104, %v92, 0.0
  %v113 = vadd.f32 %v111, %v112
  %v114 = vsel %vm104, %v93, 0.0
  %v115 = vadd.f32 %v113, %v114
  %v116 = vsel %vm104, %v94, 0.0
  %v117 = vadd.f32 %v115, %v116
  %v118 = vsel %vm104, %v95, 0.0
  %v119 = vadd.f32 %v117, %v118
  %v120 = vsel %vm104, %v96, 0.0
  %v121 = vadd.f32 %v119, %v120
  %v122 = vsel %vm104, %v97, 0.0
  %v123 = vadd.f32 %v121, %v122
  %v124 = vsel %vm104, %v98, 0.0
  %v125 = vadd.f32 %v123, %v124
  %v126 = vsel %vm104, %v99, 0.0
  %v127 = vadd.f32 %v125, %v126
  %v128 = vsel %vm104, %v100, 0.0
  %v129 = vadd.f32 %v127, %v128
  %v130 = vsel %vm104, %v101, 0.0
  %v131 = vadd.f32 %v129, %v130
  %v132 = vsel %vm104, %v102, 0.0
  %v133 = vadd.f32 %v131, %v132
  %v134 = vsel %vm104, %v103, 0.0
  %v135 = vadd.f32 %v133, %v134
  %136 = vadd.xlane.f32.xlu0 %v135
  %v137 = vpop.xlane.xlu0 %136
  %v138 = vrot.slane %v137, 4
  %v139 = vadd.f32 %v137, %v138
  %v140 = vrot.slane %v139, 2
  %v141 = vadd.f32 %v139, %v140
  %v142 = vrot.slane %v141, 1
  %v143 = vadd.f32 %v141, %v142
  %s144 = vtos %v143
  %v145 = vstv %s144
  %v146 = vrsqrt.pop %v145
  %v147 = vmul.f32 %v145, %v146
  %vm148 = vcmp.eq.f32.partialorder %v145, inf
  %v149 = vsel %vm148, %v145, %v147
  %vm150 = vcmp.eq.f32.partialorder %v145, 0.0
  %v151 = vand.u32 %v145, 2147483648
  %v152 = vsel %vm150, %v151, %v149
  %v153 = vadd.f32 %v152, 1e-12
  %v154 = vrcp.pop %v153
  %v155 = vmul.f32 %v57, %v154
  %v156 = vmul.f32 %v59, %v154
  %v157 = vmul.f32 %v61, %v154
  %v158 = vmul.f32 %v63, %v154
  %v159 = vmul.f32 %v65, %v154
  %v160 = vmul.f32 %v67, %v154
  %v161 = vmul.f32 %v69, %v154
  %v162 = vmul.f32 %v71, %v154
  %v163 = vmul.f32 %v73, %v154
  %v164 = vmul.f32 %v75, %v154
  %v165 = vmul.f32 %v77, %v154
  %v166 = vmul.f32 %v79, %v154
  %v167 = vmul.f32 %v81, %v154
  %v168 = vmul.f32 %v83, %v154
  %v169 = vmul.f32 %v85, %v154
  %v170 = vmul.f32 %v87, %v154
  %v171 = vmul.f32 %v17, %v155
  %v172 = vmul.f32 %v18, %v156
  %v173 = vmul.f32 %v19, %v157
  %v174 = vmul.f32 %v20, %v158
  %v175 = vmul.f32 %v21, %v159
  %v176 = vmul.f32 %v22, %v160
  %v177 = vmul.f32 %v23, %v161
  %v178 = vmul.f32 %v24, %v162
  %v179 = vmul.f32 %v25, %v163
  %v180 = vmul.f32 %v26, %v164
  %v181 = vmul.f32 %v27, %v165
  %v182 = vmul.f32 %v28, %v166
  %v183 = vmul.f32 %v29, %v167
  %v184 = vmul.f32 %v30, %v168
  %v185 = vmul.f32 %v31, %v169
  %v186 = vmul.f32 %v32, %v170
  %v187 = vadd.f32 %v171, %v172
  %v188 = vadd.f32 %v187, %v173
  %v189 = vadd.f32 %v188, %v174
  %v190 = vadd.f32 %v189, %v175
  %v191 = vadd.f32 %v190, %v176
  %v192 = vadd.f32 %v191, %v177
  %v193 = vadd.f32 %v192, %v178
  %v194 = vadd.f32 %v193, %v179
  %v195 = vadd.f32 %v194, %v180
  %v196 = vadd.f32 %v195, %v181
  %v197 = vadd.f32 %v196, %v182
  %v198 = vadd.f32 %v197, %v183
  %v199 = vadd.f32 %v198, %v184
  %v200 = vadd.f32 %v199, %v185
  %v201 = vadd.f32 %v200, %v186
  %v202 = vrot.slane %v201, 4
  %v203 = vadd.f32 %v201, %v202
  %v204 = vrot.slane %v203, 2
  %v205 = vadd.f32 %v203, %v204
  %v206 = vrot.slane %v205, 1
  %v207 = vadd.f32 %v205, %v206
  %v208 = vmul.f32 %v207, %v207
  %vm209 = vcmask 1040384
  %v210 = vsel %vm209, %v208, 0.0
  %211 = vadd.xlane.f32.xlu0 %v210
  %v212 = vpop.xlane.xlu0 %211
  %v213 = vrot.slane %v212, 4
  %v214 = vadd.f32 %v212, %v213
  %v215 = vrot.slane %v214, 2
  %v216 = vadd.f32 %v214, %v215
  %v217 = vrot.slane %v216, 1
  %v218 = vadd.f32 %v216, %v217
  %s219 = vtos %v218
  %v220 = vstv %s219
  %v221 = vrsqrt.pop %v220
  %v222 = vmul.f32 %v220, %v221
  %vm223 = vcmp.eq.f32.partialorder %v220, inf
  %v224 = vsel %vm223, %v220, %v222
  %vm225 = vcmp.eq.f32.partialorder %v220, 0.0
  %v226 = vand.u32 %v220, 2147483648
  %v227 = vsel %vm225, %v226, %v224
  %v228 = vadd.f32 %v227, 1e-12
  %v229 = vrcp.pop %v228
  %v230 = vmul.f32 %v207, %v229
  %v231 = vmul.f32 %v230, %v207
  %v232 = vsel %vm209, %v231, 0.0
  %233 = vadd.xlane.f32.xlu0 %v232
  %v234 = vpop.xlane.xlu0 %233
  %v235 = vrot.slane %v234, 4
  %v236 = vadd.f32 %v234, %v235
  %v237 = vrot.slane %v236, 2
  %v238 = vadd.f32 %v236, %v237
  %v239 = vrot.slane %v238, 1
  %v240 = vadd.f32 %v238, %v239
  %s241 = vtos %v240
  %v242 = vstv %s241
  %v243 = vrcp.pop %v242
  %v244 = vmul.f32 %v17, %v243
  %v245 = vmul.f32 %v18, %v243
  %v246 = vmul.f32 %v19, %v243
  %v247 = vmul.f32 %v20, %v243
  %v248 = vmul.f32 %v21, %v243
  %v249 = vmul.f32 %v22, %v243
  %v250 = vmul.f32 %v23, %v243
  %v251 = vmul.f32 %v24, %v243
  %v252 = vmul.f32 %v25, %v243
  %v253 = vmul.f32 %v26, %v243
  %v254 = vmul.f32 %v27, %v243
  %v255 = vmul.f32 %v28, %v243
  %v256 = vmul.f32 %v29, %v243
  %v257 = vmul.f32 %v30, %v243
  %v258 = vmul.f32 %v31, %v243
  %v259 = vmul.f32 %v32, %v243
  %v260 = vpack.c.bf16 %v245, %v244
  %v261 = vpack.c.bf16 %v247, %v246
  %v262 = vpack.c.bf16 %v249, %v248
  %v263 = vpack.c.bf16 %v251, %v250
  %v264 = vpack.c.bf16 %v253, %v252
  %v265 = vpack.c.bf16 %v255, %v254
  %v266 = vpack.c.bf16 %v257, %v256
  %v267 = vpack.c.bf16 %v259, %v258
  %v276 = vunpack.c.l.b16 %v260
  %v277 = vunpack.c.h.b16 %v260
  %v278 = vunpack.c.l.b16 %v261
  %v279 = vunpack.c.h.b16 %v261
  %v280 = vunpack.c.l.b16 %v262
  %v281 = vunpack.c.h.b16 %v262
  %v282 = vunpack.c.l.b16 %v263
  %v283 = vunpack.c.h.b16 %v263
  %v284 = vunpack.c.l.b16 %v264
  %v285 = vunpack.c.h.b16 %v264
  %v286 = vunpack.c.l.b16 %v265
  %v287 = vunpack.c.h.b16 %v265
  %v288 = vunpack.c.l.b16 %v266
  %v289 = vunpack.c.h.b16 %v266
  %v290 = vunpack.c.l.b16 %v267
  %v291 = vunpack.c.h.b16 %v267
  %v292 = vpack.c.b16 %v276, %v276
  %v293 = vpack.c.b16 %v277, %v277
  %v294 = vpack.c.b16 %v278, %v278
  %v295 = vpack.c.b16 %v279, %v279
  %v296 = vpack.c.b16 %v280, %v280
  %v297 = vpack.c.b16 %v281, %v281
  %v298 = vpack.c.b16 %v282, %v282
  %v299 = vpack.c.b16 %v283, %v283
  %v300 = vpack.c.b16 %v284, %v284
  %v301 = vpack.c.b16 %v285, %v285
  %v302 = vpack.c.b16 %v286, %v286
  %v303 = vpack.c.b16 %v287, %v287
  %v304 = vpack.c.b16 %v288, %v288
  %v305 = vpack.c.b16 %v289, %v289
  %v306 = vpack.c.b16 %v290, %v290
  %v307 = vpack.c.b16 %v291, %v291
  %324 = vst [vmem:[%s3] sm:$0xf] %v292
  %325 = vst [vmem:[%s3 + $0x4] sm:$0xf] %v293
  %326 = vst [vmem:[%s3 + $0x8] sm:$0xf] %v294
  %327 = vst [vmem:[%s3 + $0xc] sm:$0xf] %v295
  %328 = vst [vmem:[%s3 + $0x10] sm:$0xf] %v296
  %329 = vst [vmem:[%s3 + $0x14] sm:$0xf] %v297
  %330 = vst [vmem:[%s3 + $0x18] sm:$0xf] %v298
  %331 = vst [vmem:[%s3 + $0x1c] sm:$0xf] %v299
  %332 = vst [vmem:[%s3 + $0x20] sm:$0xf] %v300
  %333 = vst [vmem:[%s3 + $0x24] sm:$0xf] %v301
  %334 = vst [vmem:[%s3 + $0x28] sm:$0xf] %v302
  %335 = vst [vmem:[%s3 + $0x2c] sm:$0xf] %v303
  %336 = vst [vmem:[%s3 + $0x30] sm:$0xf] %v304
  %337 = vst [vmem:[%s3 + $0x34] sm:$0xf] %v305
  %338 = vst [vmem:[%s3 + $0x38] sm:$0xf] %v306
  %339 = vst [vmem:[%s3 + $0x3c] sm:$0xf] %v307
  %340 = vst [vmem:[%s4] sm:$0x1] %v230
  %341 = vst.msk [vmem:[%s5] sm:$0xff] %vm104, %v155
  %342 = vst.msk [vmem:[%s5 + $0x8] sm:$0xff] %vm104, %v156
  %343 = vst.msk [vmem:[%s5 + $0x10] sm:$0xff] %vm104, %v157
  %344 = vst.msk [vmem:[%s5 + $0x18] sm:$0xff] %vm104, %v158
  %345 = vst.msk [vmem:[%s5 + $0x20] sm:$0xff] %vm104, %v159
  %346 = vst.msk [vmem:[%s5 + $0x28] sm:$0xff] %vm104, %v160
  %347 = vst.msk [vmem:[%s5 + $0x30] sm:$0xff] %vm104, %v161
  %348 = vst.msk [vmem:[%s5 + $0x38] sm:$0xff] %vm104, %v162
  %349 = vst.msk [vmem:[%s5 + $0x40] sm:$0xff] %vm104, %v163
  %350 = vst.msk [vmem:[%s5 + $0x48] sm:$0xff] %vm104, %v164
  %351 = vst.msk [vmem:[%s5 + $0x50] sm:$0xff] %vm104, %v165
  %352 = vst.msk [vmem:[%s5 + $0x58] sm:$0xff] %vm104, %v166
  %353 = vst.msk [vmem:[%s5 + $0x60] sm:$0xff] %vm104, %v167
  %354 = vst.msk [vmem:[%s5 + $0x68] sm:$0xff] %vm104, %v168
  %355 = vst.msk [vmem:[%s5 + $0x70] sm:$0xff] %vm104, %v169
  %356 = vst.msk [vmem:[%s5 + $0x78] sm:$0xff] %vm104, %v170
  // Predicated region
  $region14: #{spectral_norm_conv_forward.2} parent=0 // pred_check
    _
  $region15: #{spectral_norm_conv_forward.2} parent=0 // pred_check_branch
    %358 = sbr.rel (0) target = $region17
  $region16: #{spectral_norm_conv_forward.2} parent=0 // pred_region
    _
  $region17: #{spectral_norm_conv_forward.2} parent=0 // pred_fallthru
    _
  // Predicated region
  $region18: #{spectral_norm_conv_forward.2} parent=0 // pred_check
    _
  $region19: #{spectral_norm_conv_forward.2} parent=0 // pred_check_branch
    %360 = sbr.rel (0) target = $region21
  $region20: #{spectral_norm_conv_forward.2} parent=0 // pred_region
    _
  $region21: #{spectral_norm_conv_forward.2} parent=0 // pred_fallthru
    _
  // Predicated region
  $region22: #{spectral_norm_conv_forward.2} parent=0 // pred_check
    _
  $region23: #{spectral_norm_conv_forward.2} parent=0 // pred_check_branch
    %362 = sbr.rel (0) target = $region25
  $region24: #{spectral_norm_conv_forward.2} parent=0 // pred_region
    _
  $region25: #{spectral_norm_conv_forward.2} parent=0 // pred_fallthru
    _
  // Predicated region
  $region26: #{spectral_norm_conv_forward.2} parent=0 // pred_check
    _
  $region27: #{spectral_norm_conv_forward.2} parent=0 // pred_check_branch
    %364 = sbr.rel (0) target = $region29
  $region28: #{spectral_norm_conv_forward.2} parent=0 // pred_region
    _
  $region29: #{spectral_norm_conv_forward.2} parent=0 // pred_fallthru
    _
  // Predicated region
  $region30: #{spectral_norm_conv_forward.2} parent=0 // pred_check
    _
  $region31: #{spectral_norm_conv_forward.2} parent=0 // pred_check_branch
    %366 = sbr.rel (0) target = $region33
  $region32: #{spectral_norm_conv_forward.2} parent=0 // pred_region
    _
  $region33: #{spectral_norm_conv_forward.2} parent=0 // pred_fallthru
    _
  // Predicated region
  $region34: #{spectral_norm_conv_forward.2} parent=0 // pred_check
    _
  $region35: #{spectral_norm_conv_forward.2} parent=0 // pred_check_branch
    %368 = sbr.rel (0) target = $region37
  $region36: #{spectral_norm_conv_forward.2} parent=0 // pred_region
    _
  $region37: #{spectral_norm_conv_forward.2} parent=0 // pred_fallthru
    _

// kernel: spectral_norm_conv_forward.3
$region0: #{spectral_norm_conv_forward.3}
  #allocation0 [shape = 'u32[]', space=smem, size = 0x4, offset = 0x4, fixed_abs, tag = 'smem constant byte address 0x4 - core index']
  #allocation1 [shape = 'u32[144,128]{1,0:T(1,128)}', space=vmem, size = 0x12000, scoped, tag = 'internal scratch']
  %s0 = inlined_call_operand.vmem [shape: bf16[512,128], index: 0, kind: input, shape index: {}]
  %s1 = inlined_call_operand.vmem [shape: bf16[128,128], index: 1, kind: input, shape index: {}]
  %s2 = inlined_call_operand.vmem [shape: f32[1,128], index: 2, kind: input, shape index: {}]
  %s3 = inlined_call_operand.vmem [shape: bf16[512,128], index: 3, kind: output, shape index: {}]
  %s4 = sld [smem:[#allocation0]]
  $region22: #{spectral_norm_conv_forward.3} parent=0
    _
  %s6 = ssub.s32 1, %s4
  %s7 = scalar_select 0, %s6, %s4
  // Predicated region
  $region2: #{spectral_norm_conv_forward.3} parent=0 // pred_check
    _
  $region3: #{spectral_norm_conv_forward.3} parent=0 // pred_check_branch
    %9 = sbr.rel (0) target = $region5
  $region4: #{spectral_norm_conv_forward.3} parent=0 // pred_region
    _
  $region5: #{spectral_norm_conv_forward.3} parent=0 // pred_fallthru
    _
  // Predicated region
  $region6: #{spectral_norm_conv_forward.3} parent=0 // pred_check
    _
  $region7: #{spectral_norm_conv_forward.3} parent=0 // pred_check_branch
    %11 = sbr.rel (0) target = $region9
  $region8: #{spectral_norm_conv_forward.3} parent=0 // pred_region
    _
  $region9: #{spectral_norm_conv_forward.3} parent=0 // pred_fallthru
    _
  // Predicated region
  $region10: #{spectral_norm_conv_forward.3} parent=0 // pred_check
    _
  $region11: #{spectral_norm_conv_forward.3} parent=0 // pred_check_branch
    %13 = sbr.rel (0) target = $region13
  $region12: #{spectral_norm_conv_forward.3} parent=0 // pred_region
    _
  $region13: #{spectral_norm_conv_forward.3} parent=0 // pred_fallthru
    _
  %v15 = vld [vmem:[%s0] sm:$0xf]
  %v16 = vld [vmem:[%s0 + $0x4] sm:$0xf]
  %v17 = vld [vmem:[%s0 + $0x8] sm:$0xf]
  %v18 = vld [vmem:[%s0 + $0xc] sm:$0xf]
  %v19 = vld [vmem:[%s0 + $0x10] sm:$0xf]
  %v20 = vld [vmem:[%s0 + $0x14] sm:$0xf]
  %v21 = vld [vmem:[%s0 + $0x18] sm:$0xf]
  %v22 = vld [vmem:[%s0 + $0x1c] sm:$0xf]
  %v23 = vld [vmem:[%s0 + $0x20] sm:$0xf]
  %v24 = vld [vmem:[%s0 + $0x24] sm:$0xf]
  %v25 = vld [vmem:[%s0 + $0x28] sm:$0xf]
  %v26 = vld [vmem:[%s0 + $0x2c] sm:$0xf]
  %v27 = vld [vmem:[%s0 + $0x30] sm:$0xf]
  %v28 = vld [vmem:[%s0 + $0x34] sm:$0xf]
  %v29 = vld [vmem:[%s0 + $0x38] sm:$0xf]
  %v30 = vld [vmem:[%s0 + $0x3c] sm:$0xf]
  %v31 = vld [vmem:[%s0 + $0x40] sm:$0xf]
  %v32 = vld [vmem:[%s0 + $0x44] sm:$0xf]
  %v33 = vld [vmem:[%s0 + $0x48] sm:$0xf]
  %v34 = vld [vmem:[%s0 + $0x4c] sm:$0xf]
  %v35 = vld [vmem:[%s0 + $0x50] sm:$0xf]
  %v36 = vld [vmem:[%s0 + $0x54] sm:$0xf]
  %v37 = vld [vmem:[%s0 + $0x58] sm:$0xf]
  %v38 = vld [vmem:[%s0 + $0x5c] sm:$0xf]
  %v39 = vld [vmem:[%s0 + $0x60] sm:$0xf]
  %v40 = vld [vmem:[%s0 + $0x64] sm:$0xf]
  %v41 = vld [vmem:[%s0 + $0x68] sm:$0xf]
  %v42 = vld [vmem:[%s0 + $0x6c] sm:$0xf]
  %v43 = vld [vmem:[%s0 + $0x70] sm:$0xf]
  %v44 = vld [vmem:[%s0 + $0x74] sm:$0xf]
  %v45 = vld [vmem:[%s0 + $0x78] sm:$0xf]
  %v46 = vld [vmem:[%s0 + $0x7c] sm:$0xf]
  %v47 = vld [vmem:[%s0 + $0x80] sm:$0xf]
  %v48 = vld [vmem:[%s0 + $0x84] sm:$0xf]
  %v49 = vld [vmem:[%s0 + $0x88] sm:$0xf]
  %v50 = vld [vmem:[%s0 + $0x8c] sm:$0xf]
  %v51 = vld [vmem:[%s0 + $0x90] sm:$0xf]
  %v52 = vld [vmem:[%s0 + $0x94] sm:$0xf]
  %v53 = vld [vmem:[%s0 + $0x98] sm:$0xf]
  %v54 = vld [vmem:[%s0 + $0x9c] sm:$0xf]
  %v55 = vld [vmem:[%s0 + $0xa0] sm:$0xf]
  %v56 = vld [vmem:[%s0 + $0xa4] sm:$0xf]
  %v57 = vld [vmem:[%s0 + $0xa8] sm:$0xf]
  %v58 = vld [vmem:[%s0 + $0xac] sm:$0xf]
  %v59 = vld [vmem:[%s0 + $0xb0] sm:$0xf]
  %v60 = vld [vmem:[%s0 + $0xb4] sm:$0xf]
  %v61 = vld [vmem:[%s0 + $0xb8] sm:$0xf]
  %v62 = vld [vmem:[%s0 + $0xbc] sm:$0xf]
  %v63 = vld [vmem:[%s0 + $0xc0] sm:$0xf]
  %v64 = vld [vmem:[%s0 + $0xc4] sm:$0xf]
  %v65 = vld [vmem:[%s0 + $0xc8] sm:$0xf]
  %v66 = vld [vmem:[%s0 + $0xcc] sm:$0xf]
  %v67 = vld [vmem:[%s0 + $0xd0] sm:$0xf]
  %v68 = vld [vmem:[%s0 + $0xd4] sm:$0xf]
  %v69 = vld [vmem:[%s0 + $0xd8] sm:$0xf]
  %v70 = vld [vmem:[%s0 + $0xdc] sm:$0xf]
  %v71 = vld [vmem:[%s0 + $0xe0] sm:$0xf]
  %v72 = vld [vmem:[%s0 + $0xe4] sm:$0xf]
  %v73 = vld [vmem:[%s0 + $0xe8] sm:$0xf]
  %v74 = vld [vmem:[%s0 + $0xec] sm:$0xf]
  %v75 = vld [vmem:[%s0 + $0xf0] sm:$0xf]
  %v76 = vld [vmem:[%s0 + $0xf4] sm:$0xf]
  %v77 = vld [vmem:[%s0 + $0xf8] sm:$0xf]
  %v78 = vld [vmem:[%s0 + $0xfc] sm:$0xf]
  %v79 = vld [vmem:[%s1] sm:$0xf]
  %v80 = vld [vmem:[%s1 + $0x4] sm:$0xf]
  %v81 = vld [vmem:[%s1 + $0x8] sm:$0xf]
  %v82 = vld [vmem:[%s1 + $0xc] sm:$0xf]
  %v83 = vld [vmem:[%s1 + $0x10] sm:$0xf]
  %v84 = vld [vmem:[%s1 + $0x14] sm:$0xf]
  %v85 = vld [vmem:[%s1 + $0x18] sm:$0xf]
  %v86 = vld [vmem:[%s1 + $0x1c] sm:$0xf]
  %v87 = vld [vmem:[%s1 + $0x20] sm:$0xf]
  %v88 = vld [vmem:[%s1 + $0x24] sm:$0xf]
  %v89 = vld [vmem:[%s1 + $0x28] sm:$0xf]
  %v90 = vld [vmem:[%s1 + $0x2c] sm:$0xf]
  %v91 = vld [vmem:[%s1 + $0x30] sm:$0xf]
  %v92 = vld [vmem:[%s1 + $0x34] sm:$0xf]
  %v93 = vld [vmem:[%s1 + $0x38] sm:$0xf]
  %v94 = vld [vmem:[%s1 + $0x3c] sm:$0xf]
  %v95 = vld [vmem:[%s2] sm:$0x1]
  %v97 = vlaneseq
  %v98 = vshrl.u32 %v97, 7
  %v99 = vsub.s32 0, %v98
  %v100 = vrot.slane %v95, %v99
  %v166 = vunpack.c.l.b16 %v15
  %v167 = vunpack.c.l.b16 %v16
  %v168 = vunpack.c.l.b16 %v17
  %v169 = vunpack.c.l.b16 %v18
  %v170 = vunpack.c.l.b16 %v19
  %v171 = vunpack.c.l.b16 %v20
  %v172 = vunpack.c.l.b16 %v21
  %v173 = vunpack.c.l.b16 %v22
  %v174 = vunpack.c.l.b16 %v23
  %v175 = vunpack.c.l.b16 %v24
  %v176 = vunpack.c.l.b16 %v25
  %v177 = vunpack.c.l.b16 %v26
  %v178 = vunpack.c.l.b16 %v27
  %v179 = vunpack.c.l.b16 %v28
  %v180 = vunpack.c.l.b16 %v29
  %v181 = vunpack.c.l.b16 %v30
  %v182 = vunpack.c.l.b16 %v31
  %v183 = vunpack.c.l.b16 %v32
  %v184 = vunpack.c.l.b16 %v33
  %v185 = vunpack.c.l.b16 %v34
  %v186 = vunpack.c.l.b16 %v35
  %v187 = vunpack.c.l.b16 %v36
  %v188 = vunpack.c.l.b16 %v37
  %v189 = vunpack.c.l.b16 %v38
  %v190 = vunpack.c.l.b16 %v39
  %v191 = vunpack.c.l.b16 %v40
  %v192 = vunpack.c.l.b16 %v41
  %v193 = vunpack.c.l.b16 %v42
  %v194 = vunpack.c.l.b16 %v43
  %v195 = vunpack.c.l.b16 %v44
  %v196 = vunpack.c.l.b16 %v45
  %v197 = vunpack.c.l.b16 %v46
  %v198 = vunpack.c.l.b16 %v47
  %v199 = vunpack.c.l.b16 %v48
  %v200 = vunpack.c.l.b16 %v49
  %v201 = vunpack.c.l.b16 %v50
  %v202 = vunpack.c.l.b16 %v51
  %v203 = vunpack.c.l.b16 %v52
  %v204 = vunpack.c.l.b16 %v53
  %v205 = vunpack.c.l.b16 %v54
  %v206 = vunpack.c.l.b16 %v55
  %v207 = vunpack.c.l.b16 %v56
  %v208 = vunpack.c.l.b16 %v57
  %v209 = vunpack.c.l.b16 %v58
  %v210 = vunpack.c.l.b16 %v59
  %v211 = vunpack.c.l.b16 %v60
  %v212 = vunpack.c.l.b16 %v61
  %v213 = vunpack.c.l.b16 %v62
  %v214 = vunpack.c.l.b16 %v63
  %v215 = vunpack.c.l.b16 %v64
  %v216 = vunpack.c.l.b16 %v65
  %v217 = vunpack.c.l.b16 %v66
  %v218 = vunpack.c.l.b16 %v67
  %v219 = vunpack.c.l.b16 %v68
  %v220 = vunpack.c.l.b16 %v69
  %v221 = vunpack.c.l.b16 %v70
  %v222 = vunpack.c.l.b16 %v71
  %v223 = vunpack.c.l.b16 %v72
  %v224 = vunpack.c.l.b16 %v73
  %v225 = vunpack.c.l.b16 %v74
  %v226 = vunpack.c.l.b16 %v75
  %v227 = vunpack.c.l.b16 %v76
  %v228 = vunpack.c.l.b16 %v77
  %v229 = vunpack.c.l.b16 %v78
  %v230 = vpack.c.b16 %v167, %v166
  %v231 = vpack.c.b16 %v169, %v168
  %v232 = vpack.c.b16 %v171, %v170
  %v233 = vpack.c.b16 %v173, %v172
  %v234 = vpack.c.b16 %v175, %v174
  %v235 = vpack.c.b16 %v177, %v176
  %v236 = vpack.c.b16 %v179, %v178
  %v237 = vpack.c.b16 %v181, %v180
  %v238 = vpack.c.b16 %v183, %v182
  %v239 = vpack.c.b16 %v185, %v184
  %v240 = vpack.c.b16 %v187, %v186
  %v241 = vpack.c.b16 %v189, %v188
  %v242 = vpack.c.b16 %v191, %v190
  %v243 = vpack.c.b16 %v193, %v192
  %v244 = vpack.c.b16 %v195, %v194
  %v245 = vpack.c.b16 %v197, %v196
  %v246 = vpack.c.b16 %v199, %v198
  %v247 = vpack.c.b16 %v201, %v200
  %v248 = vpack.c.b16 %v203, %v202
  %v249 = vpack.c.b16 %v205, %v204
  %v250 = vpack.c.b16 %v207, %v206
  %v251 = vpack.c.b16 %v209, %v208
  %v252 = vpack.c.b16 %v211, %v210
  %v253 = vpack.c.b16 %v213, %v212
  %v254 = vpack.c.b16 %v215, %v214
  %v255 = vpack.c.b16 %v217, %v216
  %v256 = vpack.c.b16 %v219, %v218
  %v257 = vpack.c.b16 %v221, %v220
  %v258 = vpack.c.b16 %v223, %v222
  %v259 = vpack.c.b16 %v225, %v224
  %v260 = vpack.c.b16 %v227, %v226
  %v261 = vpack.c.b16 %v229, %v228
  %v310 = vunpack.c.l.b16 %v79
  %v311 = vunpack.c.l.b16 %v80
  %v312 = vunpack.c.l.b16 %v81
  %v313 = vunpack.c.l.b16 %v82
  %v314 = vunpack.c.l.b16 %v83
  %v315 = vunpack.c.l.b16 %v84
  %v316 = vunpack.c.l.b16 %v85
  %v317 = vunpack.c.l.b16 %v86
  %v318 = vunpack.c.l.b16 %v87
  %v319 = vunpack.c.l.b16 %v88
  %v320 = vunpack.c.l.b16 %v89
  %v321 = vunpack.c.l.b16 %v90
  %v322 = vunpack.c.l.b16 %v91
  %v323 = vunpack.c.l.b16 %v92
  %v324 = vunpack.c.l.b16 %v93
  %v325 = vunpack.c.l.b16 %v94
  %v326 = vpack.c.b16 %v311, %v310
  %v327 = vpack.c.b16 %v313, %v312
  %v328 = vpack.c.b16 %v315, %v314
  %v329 = vpack.c.b16 %v317, %v316
  %v330 = vpack.c.b16 %v319, %v318
  %v331 = vpack.c.b16 %v321, %v320
  %v332 = vpack.c.b16 %v323, %v322
  %v333 = vpack.c.b16 %v325, %v324
  %342 = vmatprep.subr.bf16.mxu0 0
  %343 = vmatpush1.bf16.msra.mxu0 %v326
  %344 = vmatprep.subr.bf16.mxu0 0
  %345 = vmatpush1.bf16.msra.mxu0 %v327
  %346 = vmatprep.subr.bf16.mxu0 0
  %347 = vmatpush1.bf16.msra.mxu0 %v328
  %348 = vmatprep.subr.bf16.mxu0 0
  %349 = vmatpush1.bf16.msra.mxu0 %v329
  %350 = vmatprep.subr.bf16.mxu0 0
  %351 = vmatpush1.bf16.msra.mxu0 %v330
  %352 = vmatprep.subr.bf16.mxu0 0
  %353 = vmatpush1.bf16.msra.mxu0 %v331
  %354 = vmatprep.subr.bf16.mxu0 0
  %355 = vmatpush1.bf16.msra.mxu0 %v332
  %356 = vmatprep.subr.bf16.mxu0 0
  %357 = vmatpush1.bf16.msra.mxu0 %v333
  %358 = vmatprep.subr.bf16.mxu0 0
  %359 = vmatpush1.bf16.msra.mxu0 0
  %360 = vmatprep.subr.bf16.mxu0 0
  %361 = vmatpush1.bf16.msra.mxu0 0
  %362 = vmatprep.subr.bf16.mxu0 0
  %363 = vmatpush1.bf16.msra.mxu0 0
  %364 = vmatprep.subr.bf16.mxu0 0
  %365 = vmatpush1.bf16.msra.mxu0 0
  %366 = vmatprep.subr.bf16.mxu0 0
  %367 = vmatpush1.bf16.msra.mxu0 0
  %368 = vmatprep.subr.bf16.mxu0 0
  %369 = vmatpush1.bf16.msra.mxu0 0
  %370 = vmatprep.subr.bf16.mxu0 0
  %371 = vmatpush1.bf16.msra.mxu0 0
  %372 = vmatprep.subr.bf16.mxu0 0
  %373 = vmatpush1.bf16.msra.mxu0 0
  %374 = vmatprep.mubr.bf16.mxu0 0
  %375 = vmatmul.mubr.bf16.gmra.mrb[0].mxu0 %v230
  %v376 = vpop.f32.mrb[0].mxu0
  %v377 = vadd.f32 %v100, %v376
  %v378 = vpop.f32.mrb[0].mxu0
  %v379 = vpop.f32.mrb[0].mxu0
  %v380 = vadd.f32 %v100, %v379
  %v381 = vpop.f32.mrb[0].mxu0
  %382 = vmatprep.mubr.bf16.mxu0 0
  %383 = vmatmul.mubr.bf16.gmra.mrb[0].mxu0 %v231
  %v384 = vpop.f32.mrb[0].mxu0
  %v385 = vadd.f32 %v100, %v384
  %v386 = vpop.f32.mrb[0].mxu0
  %v387 = vpop.f32.mrb[0].mxu0
  %v388 = vadd.f32 %v100, %v387
  %v389 = vpop.f32.mrb[0].mxu0
  %390 = vmatprep.mubr.bf16.mxu0 0
  %391 = vmatmul.mubr.bf16.gmra.mrb[0].mxu0 %v232
  %v392 = vpop.f32.mrb[0].mxu0
  %v393 = vadd.f32 %v100, %v392
  %v394 = vpop.f32.mrb[0].mxu0
  %v395 = vpop.f32.mrb[0].mxu0
  %v396 = vadd.f32 %v100, %v395
  %v397 = vpop.f32.mrb[0].mxu0
  %398 = vmatprep.mubr.bf16.mxu0 0
  %399 = vmatmul.mubr.bf16.gmra.mrb[0].mxu0 %v233
  %v400 = vpop.f32.mrb[0].mxu0
  %v401 = vadd.f32 %v100, %v400
  %v402 = vpop.f32.mrb[0].mxu0
  %v403 = vpop.f32.mrb[0].mxu0
  %v404 = vadd.f32 %v100, %v403
  %v405 = vpop.f32.mrb[0].mxu0
  %406 = vmatprep.mubr.bf16.mxu0 0
  %407 = vmatmul.mubr.bf16.gmra.mrb[0].mxu0 %v234
  %v408 = vpop.f32.mrb[0].mxu0
  %v409 = vadd.f32 %v100, %v408
  %v410 = vpop.f32.mrb[0].mxu0
  %v411 = vpop.f32.mrb[0].mxu0
  %v412 = vadd.f32 %v100, %v411
  %v413 = vpop.f32.mrb[0].mxu0
  %414 = vmatprep.mubr.bf16.mxu0 0
  %415 = vmatmul.mubr.bf16.gmra.mrb[0].mxu0 %v235
  %v416 = vpop.f32.mrb[0].mxu0
  %v417 = vadd.f32 %v100, %v416
  %v418 = vpop.f32.mrb[0].mxu0
  %v419 = vpop.f32.mrb[0].mxu0
  %v420 = vadd.f32 %v100, %v419
  %v421 = vpop.f32.mrb[0].mxu0
  %422 = vmatprep.mubr.bf16.mxu0 0
  %423 = vmatmul.mubr.bf16.gmra.mrb[0].mxu0 %v236
  %v424 = vpop.f32.mrb[0].mxu0
  %v425 = vadd.f32 %v100, %v424
  %v426 = vpop.f32.mrb[0].mxu0
  %v427 = vpop.f32.mrb[0].mxu0
  %v428 = vadd.f32 %v100, %v427
  %v429 = vpop.f32.mrb[0].mxu0
  %430 = vmatprep.mubr.bf16.mxu0 0
  %431 = vmatmul.mubr.bf16.gmra.mrb[0].mxu0 %v237
  %v432 = vpop.f32.mrb[0].mxu0
  %v433 = vadd.f32 %v100, %v432
  %v434 = vpop.f32.mrb[0].mxu0
  %v435 = vpop.f32.mrb[0].mxu0
  %v436 = vadd.f32 %v100, %v435
  %v437 = vpop.f32.mrb[0].mxu0
  %438 = vmatprep.mubr.bf16.mxu0 0
  %439 = vmatmul.mubr.bf16.gmra.mrb[0].mxu0 %v238
  %v440 = vpop.f32.mrb[0].mxu0
  %v441 = vadd.f32 %v100, %v440
  %v442 = vpop.f32.mrb[0].mxu0
  %v443 = vpop.f32.mrb[0].mxu0
  %v444 = vadd.f32 %v100, %v443
  %v445 = vpop.f32.mrb[0].mxu0
  %446 = vmatprep.mubr.bf16.mxu0 0
  %447 = vmatmul.mubr.bf16.gmra.mrb[0].mxu0 %v239
  %v448 = vpop.f32.mrb[0].mxu0
  %v449 = vadd.f32 %v100, %v448
  %v450 = vpop.f32.mrb[0].mxu0
  %v451 = vpop.f32.mrb[0].mxu0
  %v452 = vadd.f32 %v100, %v451
  %v453 = vpop.f32.mrb[0].mxu0
  %454 = vmatprep.mubr.bf16.mxu0 0
  %455 = vmatmul.mubr.bf16.gmra.mrb[0].mxu0 %v240
  %v456 = vpop.f32.mrb[0].mxu0
  %v457 = vadd.f32 %v100, %v456
  %v458 = vpop.f32.mrb[0].mxu0
  %v459 = vpop.f32.mrb[0].mxu0
  %v460 = vadd.f32 %v100, %v459
  %v461 = vpop.f32.mrb[0].mxu0
  %462 = vmatprep.mubr.bf16.mxu0 0
  %463 = vmatmul.mubr.bf16.gmra.mrb[0].mxu0 %v241
  %v464 = vpop.f32.mrb[0].mxu0
  %v465 = vadd.f32 %v100, %v464
  %v466 = vpop.f32.mrb[0].mxu0
  %v467 = vpop.f32.mrb[0].mxu0
  %v468 = vadd.f32 %v100, %v467
  %v469 = vpop.f32.mrb[0].mxu0
  %470 = vmatprep.mubr.bf16.mxu0 0
  %471 = vmatmul.mubr.bf16.gmra.mrb[0].mxu0 %v242
  %v472 = vpop.f32.mrb[0].mxu0
  %v473 = vadd.f32 %v100, %v472
  %v474 = vpop.f32.mrb[0].mxu0
  %v475 = vpop.f32.mrb[0].mxu0
  %v476 = vadd.f32 %v100, %v475
  %v477 = vpop.f32.mrb[0].mxu0
  %478 = vmatprep.mubr.bf16.mxu0 0
  %479 = vmatmul.mubr.bf16.gmra.mrb[0].mxu0 %v243
  %v480 = vpop.f32.mrb[0].mxu0
  %v481 = vadd.f32 %v100, %v480
  %v482 = vpop.f32.mrb[0].mxu0
  %v483 = vpop.f32.mrb[0].mxu0
  %v484 = vadd.f32 %v100, %v483
  %v485 = vpop.f32.mrb[0].mxu0
  %486 = vmatprep.mubr.bf16.mxu0 0
  %487 = vmatmul.mubr.bf16.gmra.mrb[0].mxu0 %v244
  %v488 = vpop.f32.mrb[0].mxu0
  %v489 = vadd.f32 %v100, %v488
  %v490 = vpop.f32.mrb[0].mxu0
  %v491 = vpop.f32.mrb[0].mxu0
  %v492 = vadd.f32 %v100, %v491
  %v493 = vpop.f32.mrb[0].mxu0
  %494 = vmatprep.mubr.bf16.mxu0 0
  %495 = vmatmul.mubr.bf16.gmra.mrb[0].mxu0 %v245
  %v496 = vpop.f32.mrb[0].mxu0
  %v497 = vadd.f32 %v100, %v496
  %v498 = vpop.f32.mrb[0].mxu0
  %v499 = vpop.f32.mrb[0].mxu0
  %v500 = vadd.f32 %v100, %v499
  %v501 = vpop.f32.mrb[0].mxu0
  %502 = vmatprep.mubr.bf16.mxu0 0
  %503 = vmatmul.mubr.bf16.gmra.mrb[0].mxu0 %v246
  %v504 = vpop.f32.mrb[0].mxu0
  %v505 = vadd.f32 %v100, %v504
  %v506 = vpop.f32.mrb[0].mxu0
  %v507 = vpop.f32.mrb[0].mxu0
  %v508 = vadd.f32 %v100, %v507
  %v509 = vpop.f32.mrb[0].mxu0
  %510 = vmatprep.mubr.bf16.mxu0 0
  %511 = vmatmul.mubr.bf16.gmra.mrb[0].mxu0 %v247
  %v512 = vpop.f32.mrb[0].mxu0
  %v513 = vadd.f32 %v100, %v512
  %v514 = vpop.f32.mrb[0].mxu0
  %v515 = vpop.f32.mrb[0].mxu0
  %v516 = vadd.f32 %v100, %v515
  %v517 = vpop.f32.mrb[0].mxu0
  %518 = vmatprep.mubr.bf16.mxu0 0
  %519 = vmatmul.mubr.bf16.gmra.mrb[0].mxu0 %v248
  %v520 = vpop.f32.mrb[0].mxu0
  %v521 = vadd.f32 %v100, %v520
  %v522 = vpop.f32.mrb[0].mxu0
  %v523 = vpop.f32.mrb[0].mxu0
  %v524 = vadd.f32 %v100, %v523
  %v525 = vpop.f32.mrb[0].mxu0
  %526 = vmatprep.mubr.bf16.mxu0 0
  %527 = vmatmul.mubr.bf16.gmra.mrb[0].mxu0 %v249
  %v528 = vpop.f32.mrb[0].mxu0
  %v529 = vadd.f32 %v100, %v528
  %v530 = vpop.f32.mrb[0].mxu0
  %v531 = vpop.f32.mrb[0].mxu0
  %v532 = vadd.f32 %v100, %v531
  %v533 = vpop.f32.mrb[0].mxu0
  %534 = vmatprep.mubr.bf16.mxu0 0
  %535 = vmatmul.mubr.bf16.gmra.mrb[0].mxu0 %v250
  %v536 = vpop.f32.mrb[0].mxu0
  %v537 = vadd.f32 %v100, %v536
  %v538 = vpop.f32.mrb[0].mxu0
  %v539 = vpop.f32.mrb[0].mxu0
  %v540 = vadd.f32 %v100, %v539
  %v541 = vpop.f32.mrb[0].mxu0
  %542 = vmatprep.mubr.bf16.mxu0 0
  %543 = vmatmul.mubr.bf16.gmra.mrb[0].mxu0 %v251
  %v544 = vpop.f32.mrb[0].mxu0
  %v545 = vadd.f32 %v100, %v544
  %v546 = vpop.f32.mrb[0].mxu0
  %v547 = vpop.f32.mrb[0].mxu0
  %v548 = vadd.f32 %v100, %v547
  %v549 = vpop.f32.mrb[0].mxu0
  %550 = vmatprep.mubr.bf16.mxu0 0
  %551 = vmatmul.mubr.bf16.gmra.mrb[0].mxu0 %v252
  %v552 = vpop.f32.mrb[0].mxu0
  %v553 = vadd.f32 %v100, %v552
  %v554 = vpop.f32.mrb[0].mxu0
  %v555 = vpop.f32.mrb[0].mxu0
  %v556 = vadd.f32 %v100, %v555
  %v557 = vpop.f32.mrb[0].mxu0
  %558 = vmatprep.mubr.bf16.mxu0 0
  %559 = vmatmul.mubr.bf16.gmra.mrb[0].mxu0 %v253
  %v560 = vpop.f32.mrb[0].mxu0
  %v561 = vadd.f32 %v100, %v560
  %v562 = vpop.f32.mrb[0].mxu0
  %v563 = vpop.f32.mrb[0].mxu0
  %v564 = vadd.f32 %v100, %v563
  %v565 = vpop.f32.mrb[0].mxu0
  %566 = vmatprep.mubr.bf16.mxu0 0
  %567 = vmatmul.mubr.bf16.gmra.mrb[0].mxu0 %v254
  %v568 = vpop.f32.mrb[0].mxu0
  %v569 = vadd.f32 %v100, %v568
  %v570 = vpop.f32.mrb[0].mxu0
  %v571 = vpop.f32.mrb[0].mxu0
  %v572 = vadd.f32 %v100, %v571
  %v573 = vpop.f32.mrb[0].mxu0
  %574 = vmatprep.mubr.bf16.mxu0 0
  %575 = vmatmul.mubr.bf16.gmra.mrb[0].mxu0 %v255
  %v576 = vpop.f32.mrb[0].mxu0
  %v577 = vadd.f32 %v100, %v576
  %v578 = vpop.f32.mrb[0].mxu0
  %v579 = vpop.f32.mrb[0].mxu0
  %v580 = vadd.f32 %v100, %v579
  %v581 = vpop.f32.mrb[0].mxu0
  %582 = vmatprep.mubr.bf16.mxu0 0
  %583 = vmatmul.mubr.bf16.gmra.mrb[0].mxu0 %v256
  %v584 = vpop.f32.mrb[0].mxu0
  %v585 = vadd.f32 %v100, %v584
  %v586 = vpop.f32.mrb[0].mxu0
  %v587 = vpop.f32.mrb[0].mxu0
  %v588 = vadd.f32 %v100, %v587
  %v589 = vpop.f32.mrb[0].mxu0
  %590 = vmatprep.mubr.bf16.mxu0 0
  %591 = vmatmul.mubr.bf16.gmra.mrb[0].mxu0 %v257
  %v592 = vpop.f32.mrb[0].mxu0
  %v593 = vadd.f32 %v100, %v592
  %v594 = vpop.f32.mrb[0].mxu0
  %v595 = vpop.f32.mrb[0].mxu0
  %v596 = vadd.f32 %v100, %v595
  %v597 = vpop.f32.mrb[0].mxu0
  %598 = vmatprep.mubr.bf16.mxu0 0
  %599 = vmatmul.mubr.bf16.gmra.mrb[0].mxu0 %v258
  %v600 = vpop.f32.mrb[0].mxu0
  %v601 = vadd.f32 %v100, %v600
  %v602 = vpop.f32.mrb[0].mxu0
  %v603 = vpop.f32.mrb[0].mxu0
  %v604 = vadd.f32 %v100, %v603
  %v605 = vpop.f32.mrb[0].mxu0
  %606 = vmatprep.mubr.bf16.mxu0 0
  %607 = vmatmul.mubr.bf16.gmra.mrb[0].mxu0 %v259
  %v608 = vpop.f32.mrb[0].mxu0
  %v609 = vadd.f32 %v100, %v608
  %v610 = vpop.f32.mrb[0].mxu0
  %v611 = vpop.f32.mrb[0].mxu0
  %v612 = vadd.f32 %v100, %v611
  %v613 = vpop.f32.mrb[0].mxu0
  %614 = vmatprep.mubr.bf16.mxu0 0
  %615 = vmatmul.mubr.bf16.gmra.mrb[0].mxu0 %v260
  %v616 = vpop.f32.mrb[0].mxu0
  %v617 = vadd.f32 %v100, %v616
  %v618 = vpop.f32.mrb[0].mxu0
  %v619 = vpop.f32.mrb[0].mxu0
  %v620 = vadd.f32 %v100, %v619
  %v621 = vpop.f32.mrb[0].mxu0
  %622 = vmatprep.mubr.bf16.mxu0 0
  %623 = vmatmul.mubr.bf16.gmra.mrb[0].mxu0 %v261
  %v624 = vpop.f32.mrb[0].mxu0
  %v625 = vadd.f32 %v100, %v624
  %v626 = vpop.f32.mrb[0].mxu0
  %v627 = vpop.f32.mrb[0].mxu0
  %v628 = vadd.f32 %v100, %v627
  %v629 = vpop.f32.mrb[0].mxu0
  %630 = vdwg.mxu0
  %v631 = vpack.c.bf16 %v380, %v377
  %v632 = vpack.c.bf16 %v388, %v385
  %v633 = vpack.c.bf16 %v396, %v393
  %v634 = vpack.c.bf16 %v404, %v401
  %v635 = vpack.c.bf16 %v412, %v409
  %v636 = vpack.c.bf16 %v420, %v417
  %v637 = vpack.c.bf16 %v428, %v425
  %v638 = vpack.c.bf16 %v436, %v433
  %v639 = vpack.c.bf16 %v444, %v441
  %v640 = vpack.c.bf16 %v452, %v449
  %v641 = vpack.c.bf16 %v460, %v457
  %v642 = vpack.c.bf16 %v468, %v465
  %v643 = vpack.c.bf16 %v476, %v473
  %v644 = vpack.c.bf16 %v484, %v481
  %v645 = vpack.c.bf16 %v492, %v489
  %v646 = vpack.c.bf16 %v500, %v497
  %v647 = vpack.c.bf16 %v508, %v505
  %v648 = vpack.c.bf16 %v516, %v513
  %v649 = vpack.c.bf16 %v524, %v521
  %v650 = vpack.c.bf16 %v532, %v529
  %v651 = vpack.c.bf16 %v540, %v537
  %v652 = vpack.c.bf16 %v548, %v545
  %v653 = vpack.c.bf16 %v556, %v553
  %v654 = vpack.c.bf16 %v564, %v561
  %v655 = vpack.c.bf16 %v572, %v569
  %v656 = vpack.c.bf16 %v580, %v577
  %v657 = vpack.c.bf16 %v588, %v585
  %v658 = vpack.c.bf16 %v596, %v593
  %v659 = vpack.c.bf16 %v604, %v601
  %v660 = vpack.c.bf16 %v612, %v609
  %v661 = vpack.c.bf16 %v620, %v617
  %v662 = vpack.c.bf16 %v628, %v625
  %v695 = vunpack.c.l.b16 %v631
  %v696 = vunpack.c.h.b16 %v631
  %v697 = vunpack.c.l.b16 %v632
  %v698 = vunpack.c.h.b16 %v632
  %v699 = vunpack.c.l.b16 %v633
  %v700 = vunpack.c.h.b16 %v633
  %v701 = vunpack.c.l.b16 %v634
  %v702 = vunpack.c.h.b16 %v634
  %v703 = vunpack.c.l.b16 %v635
  %v704 = vunpack.c.h.b16 %v635
  %v705 = vunpack.c.l.b16 %v636
  %v706 = vunpack.c.h.b16 %v636
  %v707 = vunpack.c.l.b16 %v637
  %v708 = vunpack.c.h.b16 %v637
  %v709 = vunpack.c.l.b16 %v638
  %v710 = vunpack.c.h.b16 %v638
  %v711 = vunpack.c.l.b16 %v639
  %v712 = vunpack.c.h.b16 %v639
  %v713 = vunpack.c.l.b16 %v640
  %v714 = vunpack.c.h.b16 %v640
  %v715 = vunpack.c.l.b16 %v641
  %v716 = vunpack.c.h.b16 %v641
  %v717 = vunpack.c.l.b16 %v642
  %v718 = vunpack.c.h.b16 %v642
  %v719 = vunpack.c.l.b16 %v643
  %v720 = vunpack.c.h.b16 %v643
  %v721 = vunpack.c.l.b16 %v644
  %v722 = vunpack.c.h.b16 %v644
  %v723 = vunpack.c.l.b16 %v645
  %v724 = vunpack.c.h.b16 %v645
  %v725 = vunpack.c.l.b16 %v646
  %v726 = vunpack.c.h.b16 %v646
  %v727 = vunpack.c.l.b16 %v647
  %v728 = vunpack.c.h.b16 %v647
  %v729 = vunpack.c.l.b16 %v648
  %v730 = vunpack.c.h.b16 %v648
  %v731 = vunpack.c.l.b16 %v649
  %v732 = vunpack.c.h.b16 %v649
  %v733 = vunpack.c.l.b16 %v650
  %v734 = vunpack.c.h.b16 %v650
  %v735 = vunpack.c.l.b16 %v651
  %v736 = vunpack.c.h.b16 %v651
  %v737 = vunpack.c.l.b16 %v652
  %v738 = vunpack.c.h.b16 %v652
  %v739 = vunpack.c.l.b16 %v653
  %v740 = vunpack.c.h.b16 %v653
  %v741 = vunpack.c.l.b16 %v654
  %v742 = vunpack.c.h.b16 %v654
  %v743 = vunpack.c.l.b16 %v655
  %v744 = vunpack.c.h.b16 %v655
  %v745 = vunpack.c.l.b16 %v656
  %v746 = vunpack.c.h.b16 %v656
  %v747 = vunpack.c.l.b16 %v657
  %v748 = vunpack.c.h.b16 %v657
  %v749 = vunpack.c.l.b16 %v658
  %v750 = vunpack.c.h.b16 %v658
  %v751 = vunpack.c.l.b16 %v659
  %v752 = vunpack.c.h.b16 %v659
  %v753 = vunpack.c.l.b16 %v660
  %v754 = vunpack.c.h.b16 %v660
  %v755 = vunpack.c.l.b16 %v661
  %v756 = vunpack.c.h.b16 %v661
  %v757 = vunpack.c.l.b16 %v662
  %v758 = vunpack.c.h.b16 %v662
  %v759 = vpack.c.b16 %v695, %v695
  %v760 = vpack.c.b16 %v696, %v696
  %v761 = vpack.c.b16 %v697, %v697
  %v762 = vpack.c.b16 %v698, %v698
  %v763 = vpack.c.b16 %v699, %v699
  %v764 = vpack.c.b16 %v700, %v700
  %v765 = vpack.c.b16 %v701, %v701
  %v766 = vpack.c.b16 %v702, %v702
  %v767 = vpack.c.b16 %v703, %v703
  %v768 = vpack.c.b16 %v704, %v704
  %v769 = vpack.c.b16 %v705, %v705
  %v770 = vpack.c.b16 %v706, %v706
  %v771 = vpack.c.b16 %v707, %v707
  %v772 = vpack.c.b16 %v708, %v708
  %v773 = vpack.c.b16 %v709, %v709
  %v774 = vpack.c.b16 %v710, %v710
  %v775 = vpack.c.b16 %v711, %v711
  %v776 = vpack.c.b16 %v712, %v712
  %v777 = vpack.c.b16 %v713, %v713
  %v778 = vpack.c.b16 %v714, %v714
  %v779 = vpack.c.b16 %v715, %v715
  %v780 = vpack.c.b16 %v716, %v716
  %v781 = vpack.c.b16 %v717, %v717
  %v782 = vpack.c.b16 %v718, %v718
  %v783 = vpack.c.b16 %v719, %v719
  %v784 = vpack.c.b16 %v720, %v720
  %v785 = vpack.c.b16 %v721, %v721
  %v786 = vpack.c.b16 %v722, %v722
  %v787 = vpack.c.b16 %v723, %v723
  %v788 = vpack.c.b16 %v724, %v724
  %v789 = vpack.c.b16 %v725, %v725
  %v790 = vpack.c.b16 %v726, %v726
  %v791 = vpack.c.b16 %v727, %v727
  %v792 = vpack.c.b16 %v728, %v728
  %v793 = vpack.c.b16 %v729, %v729
  %v794 = vpack.c.b16 %v730, %v730
  %v795 = vpack.c.b16 %v731, %v731
  %v796 = vpack.c.b16 %v732, %v732
  %v797 = vpack.c.b16 %v733, %v733
  %v798 = vpack.c.b16 %v734, %v734
  %v799 = vpack.c.b16 %v735, %v735
  %v800 = vpack.c.b16 %v736, %v736
  %v801 = vpack.c.b16 %v737, %v737
  %v802 = vpack.c.b16 %v738, %v738
  %v803 = vpack.c.b16 %v739, %v739
  %v804 = vpack.c.b16 %v740, %v740
  %v805 = vpack.c.b16 %v741, %v741
  %v806 = vpack.c.b16 %v742, %v742
  %v807 = vpack.c.b16 %v743, %v743
  %v808 = vpack.c.b16 %v744, %v744
  %v809 = vpack.c.b16 %v745, %v745
  %v810 = vpack.c.b16 %v746, %v746
  %v811 = vpack.c.b16 %v747, %v747
  %v812 = vpack.c.b16 %v748, %v748
  %v813 = vpack.c.b16 %v749, %v749
  %v814 = vpack.c.b16 %v750, %v750
  %v815 = vpack.c.b16 %v751, %v751
  %v816 = vpack.c.b16 %v752, %v752
  %v817 = vpack.c.b16 %v753, %v753
  %v818 = vpack.c.b16 %v754, %v754
  %v819 = vpack.c.b16 %v755, %v755
  %v820 = vpack.c.b16 %v756, %v756
  %v821 = vpack.c.b16 %v757, %v757
  %v822 = vpack.c.b16 %v758, %v758
  %887 = vst [vmem:[%s3] sm:$0xf] %v759
  %888 = vst [vmem:[%s3 + $0x4] sm:$0xf] %v760
  %889 = vst [vmem:[%s3 + $0x8] sm:$0xf] %v761
  %890 = vst [vmem:[%s3 + $0xc] sm:$0xf] %v762
  %891 = vst [vmem:[%s3 + $0x10] sm:$0xf] %v763
  %892 = vst [vmem:[%s3 + $0x14] sm:$0xf] %v764
  %893 = vst [vmem:[%s3 + $0x18] sm:$0xf] %v765
  %894 = vst [vmem:[%s3 + $0x1c] sm:$0xf] %v766
  %895 = vst [vmem:[%s3 + $0x20] sm:$0xf] %v767
  %896 = vst [vmem:[%s3 + $0x24] sm:$0xf] %v768
  %897 = vst [vmem:[%s3 + $0x28] sm:$0xf] %v769
  %898 = vst [vmem:[%s3 + $0x2c] sm:$0xf] %v770
  %899 = vst [vmem:[%s3 + $0x30] sm:$0xf] %v771
  %900 = vst [vmem:[%s3 + $0x34] sm:$0xf] %v772
  %901 = vst [vmem:[%s3 + $0x38] sm:$0xf] %v773
  %902 = vst [vmem:[%s3 + $0x3c] sm:$0xf] %v774
  %903 = vst [vmem:[%s3 + $0x40] sm:$0xf] %v775
  %904 = vst [vmem:[%s3 + $0x44] sm:$0xf] %v776
  %905 = vst [vmem:[%s3 + $0x48] sm:$0xf] %v777
  %906 = vst [vmem:[%s3 + $0x4c] sm:$0xf] %v778
  %907 = vst [vmem:[%s3 + $0x50] sm:$0xf] %v779
  %908 = vst [vmem:[%s3 + $0x54] sm:$0xf] %v780
  %909 = vst [vmem:[%s3 + $0x58] sm:$0xf] %v781
  %910 = vst [vmem:[%s3 + $0x5c] sm:$0xf] %v782
  %911 = vst [vmem:[%s3 + $0x60] sm:$0xf] %v783
  %912 = vst [vmem:[%s3 + $0x64] sm:$0xf] %v784
  %913 = vst [vmem:[%s3 + $0x68] sm:$0xf] %v785
  %914 = vst [vmem:[%s3 + $0x6c] sm:$0xf] %v786
  %915 = vst [vmem:[%s3 + $0x70] sm:$0xf] %v787
  %916 = vst [vmem:[%s3 + $0x74] sm:$0xf] %v788
  %917 = vst [vmem:[%s3 + $0x78] sm:$0xf] %v789
  %918 = vst [vmem:[%s3 + $0x7c] sm:$0xf] %v790
  %919 = vst [vmem:[%s3 + $0x80] sm:$0xf] %v791
  %920 = vst [vmem:[%s3 + $0x84] sm:$0xf] %v792
  %921 = vst [vmem:[%s3 + $0x88] sm:$0xf] %v793
  %922 = vst [vmem:[%s3 + $0x8c] sm:$0xf] %v794
  %923 = vst [vmem:[%s3 + $0x90] sm:$0xf] %v795
  %924 = vst [vmem:[%s3 + $0x94] sm:$0xf] %v796
  %925 = vst [vmem:[%s3 + $0x98] sm:$0xf] %v797
  %926 = vst [vmem:[%s3 + $0x9c] sm:$0xf] %v798
  %927 = vst [vmem:[%s3 + $0xa0] sm:$0xf] %v799
  %928 = vst [vmem:[%s3 + $0xa4] sm:$0xf] %v800
  %929 = vst [vmem:[%s3 + $0xa8] sm:$0xf] %v801
  %930 = vst [vmem:[%s3 + $0xac] sm:$0xf] %v802
  %931 = vst [vmem:[%s3 + $0xb0] sm:$0xf] %v803
  %932 = vst [vmem:[%s3 + $0xb4] sm:$0xf] %v804
  %933 = vst [vmem:[%s3 + $0xb8] sm:$0xf] %v805
  %934 = vst [vmem:[%s3 + $0xbc] sm:$0xf] %v806
  %935 = vst [vmem:[%s3 + $0xc0] sm:$0xf] %v807
  %936 = vst [vmem:[%s3 + $0xc4] sm:$0xf] %v808
  %937 = vst [vmem:[%s3 + $0xc8] sm:$0xf] %v809
  %938 = vst [vmem:[%s3 + $0xcc] sm:$0xf] %v810
  %939 = vst [vmem:[%s3 + $0xd0] sm:$0xf] %v811
  %940 = vst [vmem:[%s3 + $0xd4] sm:$0xf] %v812
  %941 = vst [vmem:[%s3 + $0xd8] sm:$0xf] %v813
  %942 = vst [vmem:[%s3 + $0xdc] sm:$0xf] %v814
  %943 = vst [vmem:[%s3 + $0xe0] sm:$0xf] %v815
  %944 = vst [vmem:[%s3 + $0xe4] sm:$0xf] %v816
  %945 = vst [vmem:[%s3 + $0xe8] sm:$0xf] %v817
  %946 = vst [vmem:[%s3 + $0xec] sm:$0xf] %v818
  %947 = vst [vmem:[%s3 + $0xf0] sm:$0xf] %v819
  %948 = vst [vmem:[%s3 + $0xf4] sm:$0xf] %v820
  %949 = vst [vmem:[%s3 + $0xf8] sm:$0xf] %v821
  %950 = vst [vmem:[%s3 + $0xfc] sm:$0xf] %v822
  // Predicated region
  $region14: #{spectral_norm_conv_forward.3} parent=0 // pred_check
    _
  $region15: #{spectral_norm_conv_forward.3} parent=0 // pred_check_branch
    %952 = sbr.rel (0) target = $region17
  $region16: #{spectral_norm_conv_forward.3} parent=0 // pred_region
    _
  $region17: #{spectral_norm_conv_forward.3} parent=0 // pred_fallthru
    _
  // Predicated region
  $region18: #{spectral_norm_conv_forward.3} parent=0 // pred_check
    _
  $region19: #{spectral_norm_conv_forward.3} parent=0 // pred_check_branch
    %954 = sbr.rel (0) target = $region21
  $region20: #{spectral_norm_conv_forward.3} parent=0 // pred_region
    _
  $region21: #{spectral_norm_conv_forward.3} parent=0 // pred_fallthru
    _

</llo_original>
